<compile_context>
chip_gen: v7x
topology: tpu7x:2x2x1
jax: 0.10.0
libtpu: 0.0.40
codegen_flags: <defaults>
</compile_context>

<pallas_src>
import jax
import jax.numpy as jnp
import numpy as np
from jax.experimental import pallas as pl
from jax.experimental.pallas import tpu as pltpu

# ----------------------------- model sizes ---------------------------------
HIDDEN = 64          # hidden_size (kept small; PyTorch default was 768)
Q_LEN = 35           # question_len (hard-coded in forward: x[:, 35:, :])
C_LEN = 40           # context_len  (hard-coded in forward: reshape(1, B*40))
SEQ_LEN = Q_LEN + C_LEN
VOCAB = 97
LAYER_SIZES = [HIDDEN, 250, 100, 40, 10, 1]
# Zero-padded layer widths used inside the kernel (exact: ReLU(0) = 0).
PAD_WIDTHS = [HIDDEN, 256, 128, 40, 16, 1]


# ------------------------------ Pallas kernel -------------------------------
def _head_kernel(x_ref, w1, b1, w2, b2, w3, b3, w4, b4, w5, b5_ref, out_ref):
    """MLP head (feature-major layout) + LogSoftmax, all in VMEM.

    x_ref  : (HIDDEN, N)   bf16  activations, rows (B*C_LEN) on the lane axis
    w1..w5 : (out_p, in_p) bf16  zero-padded transposed weights
    b1..b4 : (out_p, 1)    f32   zero-padded biases
    b5_ref : (1,)          f32   SMEM scalar bias of linear5
    out_ref: (1, N)        f32   log-softmax over all N = B*C_LEN logits
    """
    def layer(w_ref, b_ref, x):
        y = jnp.dot(w_ref[...], x, preferred_element_type=jnp.float32) + b_ref[...]
        return jnp.maximum(y, 0.0).astype(jnp.bfloat16)

    x = x_ref[...]                # (64,  N) bf16
    x = layer(w1, b1, x)          # (256, N)
    x = layer(w2, b2, x)          # (128, N)
    x = layer(w3, b3, x)          # (40,  N)
    x = layer(w4, b4, x)          # (16,  N)

    # linear5 (out_features == 1) -> lane-dense (1, N) logits, f32.
    s = jnp.dot(w5[...], x, preferred_element_type=jnp.float32) + b5_ref[0]

    # LogSoftmax over the single flattened dim (dim=1 of the (1, N) tensor in
    # PyTorch) as a lane-direction reduction (XLU), all in f32.
    m = jnp.max(s, axis=-1, keepdims=True)
    e = jnp.exp(s - m)
    lse = jnp.log(jnp.sum(e, axis=-1, keepdims=True)) + m
    out_ref[...] = s - lse


# ------------------------------ wrapper (glue) -------------------------------
def _pack_params(params):
    """Transpose to (out, in), zero-pad to PAD_WIDTHS, cast weights to bf16."""
    packed = []
    for i, (w, b) in enumerate(params):
        din, dout = w.shape
        pin, pout = PAD_WIDTHS[i], PAD_WIDTHS[i + 1]
        wt = jnp.zeros((pout, pin), jnp.float32).at[:dout, :din].set(w.T)
        packed.append(wt.astype(jnp.bfloat16))
        if i < 4:
            bp = jnp.zeros((pout, 1), jnp.float32).at[:dout, 0].set(b[0])
            packed.append(bp)
    packed.append(params[4][1].reshape(1))   # b5 as SMEM scalar (f32)
    return packed


def end_model_head(h, params):
    """h: (B, SEQ_LEN, HIDDEN) last_hidden_state -> (1, B*C_LEN) log-probs."""
    B = h.shape[0]
    N = B * C_LEN

    # Row selection BEFORE the MLP (commutes with the row-wise Linear/ReLU
    # stack) + transpose to feature-major layout: pure layout plumbing done
    # once in the wrapper so the kernel output is already (1, B*C_LEN).
    x0 = h[:, Q_LEN:, :].reshape(N, HIDDEN).T.astype(jnp.bfloat16)   # (HIDDEN, N)

    args = (x0, *_pack_params(params))

    vmem = pl.BlockSpec(memory_space=pltpu.MemorySpace.VMEM)
    smem = pl.BlockSpec(memory_space=pltpu.MemorySpace.SMEM)
    return pl.pallas_call(
        _head_kernel,
        out_shape=jax.ShapeDtypeStruct((1, N), jnp.float32),
        in_specs=[vmem] * 10 + [smem],
        out_specs=vmem,
    )(*args)                       # already (1, B*C_LEN): no wrapper reshape


# ------------------------ deterministic param init --------------------------
def init_params(key):
    params = []
    for i in range(5):
        fan_in, fan_out = LAYER_SIZES[i], LAYER_SIZES[i + 1]
        key, kw, kb = jax.random.split(key, 3)
        bound = 1.0 / np.sqrt(fan_in)
        w = jax.random.uniform(kw, (fan_in, fan_out), jnp.float32, -bound, bound)
        b = jax.random.uniform(kb, (1, fan_out), jnp.float32, -bound, bound)
        params.append((w, b))
    return params


# ------------------------ BERT stand-in (plain JAX glue) ---------------------
# TODO(synk): the full BERT encoder (external `bertModel` submodule) has no
# in-script Pallas equivalent; replaced by a deterministic embedding stand-in
# producing `last_hidden_state`.
def fake_bert_last_hidden_state(key, qc, attn, tok_type):
    k1, k2, k3 = jax.random.split(key, 3)
    word_emb = jax.random.normal(k1, (VOCAB, HIDDEN), jnp.float32) * 0.02
    type_emb = jax.random.normal(k2, (2, HIDDEN), jnp.float32) * 0.02
    pos_emb = jax.random.normal(k3, (SEQ_LEN, HIDDEN), jnp.float32) * 0.02
    h = word_emb[qc] + type_emb[tok_type] + pos_emb[None, :, :]
    return jnp.tanh(h) * attn[..., None].astype(jnp.float32)


# ---------------------------- pure-JAX reference -----------------------------
def reference_forward(h, params):
    B = h.shape[0]
    x = h.reshape(B * SEQ_LEN, HIDDEN)
    for i, (w, b) in enumerate(params):
        x = x @ w + b
        if i < 4:
            x = jnp.maximum(x, 0.0)
    x = x.reshape(B, SEQ_LEN, 1)[:, Q_LEN:, :].reshape(1, B * C_LEN)
    return jax.nn.log_softmax(x, axis=1)


# ----------------------------------- main ------------------------------------
if __name__ == "__main__":
    B = 2
    root = jax.random.PRNGKey(0)
    k_in, k_bert, k_par = jax.random.split(root, 3)

    qc_tens = jax.random.randint(k_in, (B, SEQ_LEN), 0, VOCAB, dtype=jnp.int32)
    attention_tens = jnp.ones((B, SEQ_LEN), dtype=jnp.int32)
    token_type_tens = jnp.concatenate(
        [jnp.zeros((B, Q_LEN), jnp.int32), jnp.ones((B, C_LEN), jnp.int32)], axis=1)

    params = init_params(k_par)
    h = fake_bert_last_hidden_state(k_bert, qc_tens, attention_tens, token_type_tens)

    p = end_model_head(h, params)
    p = jax.block_until_ready(p)

    p_ref = reference_forward(h, params)
    assert p.shape == (1, B * C_LEN) and p.dtype == jnp.float32
    # Tolerance relaxed vs. a pure-f32 version because the MXU inputs are
    # bf16 (accumulation and the LogSoftmax remain f32).
    np.testing.assert_allclose(np.asarray(p), np.asarray(p_ref), atol=2e-2, rtol=2e-2)
    print("KERNEL_OK")
</pallas_src>

<mosaic_0001>
module attributes {stable_mosaic.version = 11 : i64} {
  func.func @_head_kernel(%arg0: memref<64x80xbf16, #tpu.memory_space<vmem>>, %arg1: memref<256x64xbf16, #tpu.memory_space<vmem>>, %arg2: memref<256x1xf32, #tpu.memory_space<vmem>>, %arg3: memref<128x256xbf16, #tpu.memory_space<vmem>>, %arg4: memref<128x1xf32, #tpu.memory_space<vmem>>, %arg5: memref<40x128xbf16, #tpu.memory_space<vmem>>, %arg6: memref<40x1xf32, #tpu.memory_space<vmem>>, %arg7: memref<16x40xbf16, #tpu.memory_space<vmem>>, %arg8: memref<16x1xf32, #tpu.memory_space<vmem>>, %arg9: memref<1x16xbf16, #tpu.memory_space<vmem>>, %arg10: memref<1xf32, #tpu.memory_space<smem>>, %arg11: memref<1x80xf32, #tpu.memory_space<vmem>>) attributes {dimension_semantics = [], scalar_prefetch = 0 : i64, scratch_operands = 0 : i64, tpu.core_type = #tpu.core_type<tc>} {
    %c0 = arith.constant 0 : index
    %c0_0 = arith.constant 0 : index
    %0 = vector.load %arg0[%c0, %c0_0] : memref<64x80xbf16, #tpu.memory_space<vmem>>, vector<64x80xbf16>
    %c0_1 = arith.constant 0 : index
    %c0_2 = arith.constant 0 : index
    %1 = vector.load %arg1[%c0_1, %c0_2] : memref<256x64xbf16, #tpu.memory_space<vmem>>, vector<256x64xbf16>
    %cst = arith.constant dense<0.000000e+00> : vector<256x80xf32>
    %2 = tpu.matmul %1, %0, %cst {dimension_numbers = #tpu.dot_dimension_numbers<[1], [0], [0], [1], [0, 0, 1, 1], [], []>} : vector<256x64xbf16>, vector<64x80xbf16>, vector<256x80xf32> -> vector<256x80xf32>
    %c0_3 = arith.constant 0 : index
    %c0_4 = arith.constant 0 : index
    %3 = vector.load %arg2[%c0_3, %c0_4] : memref<256x1xf32, #tpu.memory_space<vmem>>, vector<256x1xf32>
    %4 = vector.broadcast %3 : vector<256x1xf32> to vector<256x80xf32>
    %5 = arith.addf %2, %4 : vector<256x80xf32>
    %cst_5 = arith.constant 0.000000e+00 : f32
    %6 = vector.broadcast %cst_5 : f32 to vector<256x80xf32>
    %7 = arith.maximumf %5, %6 : vector<256x80xf32>
    %8 = arith.truncf %7 : vector<256x80xf32> to vector<256x80xbf16>
    %c0_6 = arith.constant 0 : index
    %c0_7 = arith.constant 0 : index
    %9 = vector.load %arg3[%c0_6, %c0_7] : memref<128x256xbf16, #tpu.memory_space<vmem>>, vector<128x256xbf16>
    %cst_8 = arith.constant dense<0.000000e+00> : vector<128x80xf32>
    %10 = tpu.matmul %9, %8, %cst_8 {dimension_numbers = #tpu.dot_dimension_numbers<[1], [0], [0], [1], [0, 0, 1, 1], [], []>} : vector<128x256xbf16>, vector<256x80xbf16>, vector<128x80xf32> -> vector<128x80xf32>
    %c0_9 = arith.constant 0 : index
    %c0_10 = arith.constant 0 : index
    %11 = vector.load %arg4[%c0_9, %c0_10] : memref<128x1xf32, #tpu.memory_space<vmem>>, vector<128x1xf32>
    %12 = vector.broadcast %11 : vector<128x1xf32> to vector<128x80xf32>
    %13 = arith.addf %10, %12 : vector<128x80xf32>
    %cst_11 = arith.constant 0.000000e+00 : f32
    %14 = vector.broadcast %cst_11 : f32 to vector<128x80xf32>
    %15 = arith.maximumf %13, %14 : vector<128x80xf32>
    %16 = arith.truncf %15 : vector<128x80xf32> to vector<128x80xbf16>
    %c0_12 = arith.constant 0 : index
    %c0_13 = arith.constant 0 : index
    %17 = vector.load %arg5[%c0_12, %c0_13] : memref<40x128xbf16, #tpu.memory_space<vmem>>, vector<40x128xbf16>
    %cst_14 = arith.constant dense<0.000000e+00> : vector<40x80xf32>
    %18 = tpu.matmul %17, %16, %cst_14 {dimension_numbers = #tpu.dot_dimension_numbers<[1], [0], [0], [1], [0, 0, 1, 1], [], []>} : vector<40x128xbf16>, vector<128x80xbf16>, vector<40x80xf32> -> vector<40x80xf32>
    %c0_15 = arith.constant 0 : index
    %c0_16 = arith.constant 0 : index
    %19 = vector.load %arg6[%c0_15, %c0_16] : memref<40x1xf32, #tpu.memory_space<vmem>>, vector<40x1xf32>
    %20 = vector.broadcast %19 : vector<40x1xf32> to vector<40x80xf32>
    %21 = arith.addf %18, %20 : vector<40x80xf32>
    %cst_17 = arith.constant 0.000000e+00 : f32
    %22 = vector.broadcast %cst_17 : f32 to vector<40x80xf32>
    %23 = arith.maximumf %21, %22 : vector<40x80xf32>
    %24 = arith.truncf %23 : vector<40x80xf32> to vector<40x80xbf16>
    %c0_18 = arith.constant 0 : index
    %c0_19 = arith.constant 0 : index
    %25 = vector.load %arg7[%c0_18, %c0_19] : memref<16x40xbf16, #tpu.memory_space<vmem>>, vector<16x40xbf16>
    %cst_20 = arith.constant dense<0.000000e+00> : vector<16x80xf32>
    %26 = tpu.matmul %25, %24, %cst_20 {dimension_numbers = #tpu.dot_dimension_numbers<[1], [0], [0], [1], [0, 0, 1, 1], [], []>} : vector<16x40xbf16>, vector<40x80xbf16>, vector<16x80xf32> -> vector<16x80xf32>
    %c0_21 = arith.constant 0 : index
    %c0_22 = arith.constant 0 : index
    %27 = vector.load %arg8[%c0_21, %c0_22] : memref<16x1xf32, #tpu.memory_space<vmem>>, vector<16x1xf32>
    %28 = vector.broadcast %27 : vector<16x1xf32> to vector<16x80xf32>
    %29 = arith.addf %26, %28 : vector<16x80xf32>
    %cst_23 = arith.constant 0.000000e+00 : f32
    %30 = vector.broadcast %cst_23 : f32 to vector<16x80xf32>
    %31 = arith.maximumf %29, %30 : vector<16x80xf32>
    %32 = arith.truncf %31 : vector<16x80xf32> to vector<16x80xbf16>
    %c0_24 = arith.constant 0 : index
    %c0_25 = arith.constant 0 : index
    %33 = vector.load %arg9[%c0_24, %c0_25] : memref<1x16xbf16, #tpu.memory_space<vmem>>, vector<1x16xbf16>
    %cst_26 = arith.constant dense<0.000000e+00> : vector<1x80xf32>
    %34 = tpu.matmul %33, %32, %cst_26 {dimension_numbers = #tpu.dot_dimension_numbers<[1], [0], [0], [1], [0, 0, 1, 1], [], []>} : vector<1x16xbf16>, vector<16x80xbf16>, vector<1x80xf32> -> vector<1x80xf32>
    %c0_27 = arith.constant 0 : index
    %35 = memref.load %arg10[%c0_27] : memref<1xf32, #tpu.memory_space<smem>>
    %36 = vector.broadcast %35 : f32 to vector<1x80xf32>
    %37 = arith.addf %34, %36 : vector<1x80xf32>
    %cst_28 = arith.constant dense<0xFF800000> : vector<1xf32>
    %38 = vector.multi_reduction <maximumf>, %37, %cst_28 [1] : vector<1x80xf32> to vector<1xf32>
    %39 = vector.shape_cast %38 : vector<1xf32> to vector<1x1xf32>
    %40 = vector.broadcast %39 : vector<1x1xf32> to vector<1x80xf32>
    %41 = arith.subf %37, %40 : vector<1x80xf32>
    %42 = math.exp %41 : vector<1x80xf32>
    %cst_29 = arith.constant dense<0.000000e+00> : vector<1xf32>
    %43 = vector.multi_reduction <add>, %42, %cst_29 [1] : vector<1x80xf32> to vector<1xf32>
    %44 = vector.shape_cast %43 : vector<1xf32> to vector<1x1xf32>
    %45 = math.log %44 : vector<1x1xf32>
    %46 = arith.addf %45, %39 : vector<1x1xf32>
    %47 = vector.broadcast %46 : vector<1x1xf32> to vector<1x80xf32>
    %48 = arith.subf %37, %47 : vector<1x80xf32>
    %c0_30 = arith.constant 0 : index
    %c0_31 = arith.constant 0 : index
    %49 = vector.load %arg11[%c0_30, %c0_31] : memref<1x80xf32, #tpu.memory_space<vmem>>, vector<1x80xf32>
    tpu.vector_store %arg11[%c0_30, %c0_31], %48 {strides = array<i32>} : memref<1x80xf32, #tpu.memory_space<vmem>>, vector<1x80xf32>,
    return
  }
}

</mosaic_0001>

<llo_original>
// kernel: tpu_custom_call.1
$region0: #{tpu_custom_call.1}
  #allocation0 [shape = 'u32[]', space=smem, size = 0x4, offset = 0x4, fixed_abs, tag = 'smem constant byte address 0x4 - core index']
  #allocation1 [shape = 'u32[144,128]{1,0:T(1,128)}', space=vmem, size = 0x12000, scoped, tag = 'internal scratch']
  #allocation2 [shape = 'f32[1]{0:T(128)S(6)}', space=smem, size = 0x200, scoped, tag = 'scoped memory for tpu_custom_call.1']
  %s0 = inlined_call_operand.vmem [shape: bf16[64,80], index: 0, kind: input, shape index: {}]
  %s1 = inlined_call_operand.vmem [shape: bf16[256,64], index: 1, kind: input, shape index: {}]
  %s2 = inlined_call_operand.vmem [shape: f32[256,1], index: 2, kind: input, shape index: {}]
  %s3 = inlined_call_operand.vmem [shape: bf16[128,256], index: 3, kind: input, shape index: {}]
  %s4 = inlined_call_operand.vmem [shape: f32[128,1], index: 4, kind: input, shape index: {}]
  %s5 = inlined_call_operand.vmem [shape: bf16[40,128], index: 5, kind: input, shape index: {}]
  %s6 = inlined_call_operand.vmem [shape: f32[40,1], index: 6, kind: input, shape index: {}]
  %s7 = inlined_call_operand.vmem [shape: bf16[16,40], index: 7, kind: input, shape index: {}]
  %s8 = inlined_call_operand.vmem [shape: f32[16,1], index: 8, kind: input, shape index: {}]
  %s9 = inlined_call_operand.vmem [shape: bf16[1,16], index: 9, kind: input, shape index: {}]
  %s10 = inlined_call_operand.<no memory space> [shape: f32[1], index: 10, kind: input, shape index: {}]
  %s11 = inlined_call_operand.hbm [shape: f32[1,80], index: 11, kind: output, shape index: {}]
  %s12 = sld [smem:[#allocation0]]
  $region54: #{tpu_custom_call.1} parent=0
    _
  %s14 = ssub.s32 1, %s12
  %s15 = scalar_select 0, %s14, %s12
  %16 = sst [smem:[#allocation2]] %s10
  $region1: #{tpu_custom_call.1} parent=0
    #allocation3 [shape = 'u8[512]{0}', space=vmem, size = 0x400, scoped, tag = 'output window, operand 0, single buffered']
    #allocation4 [shape = 's32[1]{0}', space=sflag, size = 0x4, scoped, tag = 'scoped memory for tpu_custom_call.1']
    %17 = vsyncpa [#allocation4], 0
    // Predicated region
    $region2: #{tpu_custom_call.1} parent=1 // pred_check
      _
    $region3: #{tpu_custom_call.1} parent=1 // pred_check_branch
      %19 = sbr.rel (0) target = $region5
    $region4: #{tpu_custom_call.1} parent=1 // pred_region
      _
    $region5: #{tpu_custom_call.1} parent=1 // pred_fallthru
      _
    // Predicated region
    $region6: #{tpu_custom_call.1} parent=1 // pred_check
      _
    $region7: #{tpu_custom_call.1} parent=1 // pred_check_branch
      %21 = sbr.rel (0) target = $region9
    $region8: #{tpu_custom_call.1} parent=1 // pred_region
      _
    $region9: #{tpu_custom_call.1} parent=1 // pred_fallthru
      _
    // Predicated region
    $region10: #{tpu_custom_call.1} parent=1 // pred_check
      _
    $region11: #{tpu_custom_call.1} parent=1 // pred_check_branch
      %23 = sbr.rel (0) target = $region13
    $region12: #{tpu_custom_call.1} parent=1 // pred_region
      _
    $region13: #{tpu_custom_call.1} parent=1 // pred_fallthru
      _
    // Predicated region
    $region14: #{tpu_custom_call.1} parent=1 // pred_check
      _
    $region15: #{tpu_custom_call.1} parent=1 // pred_check_branch
      %25 = sbr.rel (0) target = $region17
    $region16: #{tpu_custom_call.1} parent=1 // pred_region
      _
    $region17: #{tpu_custom_call.1} parent=1 // pred_fallthru
      _
    // Predicated region
    $region18: #{tpu_custom_call.1} parent=1 // pred_check
      _
    $region19: #{tpu_custom_call.1} parent=1 // pred_check_branch
      %27 = sbr.rel (0) target = $region21
    $region20: #{tpu_custom_call.1} parent=1 // pred_region
      _
    $region21: #{tpu_custom_call.1} parent=1 // pred_fallthru
      _
    // Predicated region
    $region22: #{tpu_custom_call.1} parent=1 // pred_check
      _
    $region23: #{tpu_custom_call.1} parent=1 // pred_check_branch
      %29 = sbr.rel (0) target = $region25
    $region24: #{tpu_custom_call.1} parent=1 // pred_region
      _
    $region25: #{tpu_custom_call.1} parent=1 // pred_fallthru
      _
    // Predicated region
    $region26: #{tpu_custom_call.1} parent=1 // pred_check
      _
    $region27: #{tpu_custom_call.1} parent=1 // pred_check_branch
      %31 = sbr.rel (0) target = $region29
    $region28: #{tpu_custom_call.1} parent=1 // pred_region
      _
    $region29: #{tpu_custom_call.1} parent=1 // pred_fallthru
      _
    // Predicated region
    $region30: #{tpu_custom_call.1} parent=1 // pred_check
      _
    $region31: #{tpu_custom_call.1} parent=1 // pred_check_branch
      %33 = sbr.rel (0) target = $region33
    $region32: #{tpu_custom_call.1} parent=1 // pred_region
      _
    $region33: #{tpu_custom_call.1} parent=1 // pred_fallthru
      _
    // Predicated region
    $region34: #{tpu_custom_call.1} parent=1 // pred_check
      _
    $region35: #{tpu_custom_call.1} parent=1 // pred_check_branch
      %35 = sbr.rel (0) target = $region37
    $region36: #{tpu_custom_call.1} parent=1 // pred_region
      _
    $region37: #{tpu_custom_call.1} parent=1 // pred_fallthru
      _
    // Predicated region
    $region38: #{tpu_custom_call.1} parent=1 // pred_check
      _
    $region39: #{tpu_custom_call.1} parent=1 // pred_check_branch
      %37 = sbr.rel (0) target = $region41
    $region40: #{tpu_custom_call.1} parent=1 // pred_region
      _
    $region41: #{tpu_custom_call.1} parent=1 // pred_fallthru
      _
    // Predicated region
    $region42: #{tpu_custom_call.1} parent=1 // pred_check
      _
    $region43: #{tpu_custom_call.1} parent=1 // pred_check_branch
      %39 = sbr.rel (0) target = $region45
    $region44: #{tpu_custom_call.1} parent=1 // pred_region
      _
    $region45: #{tpu_custom_call.1} parent=1 // pred_fallthru
      _
    %v41 = vld [vmem:[%s0] sm:$0xf]
    %v42 = vld [vmem:[%s0 + $0x4] sm:$0xf]
    %v43 = vld [vmem:[%s0 + $0x8] sm:$0xf]
    %v44 = vld [vmem:[%s0 + $0xc] sm:$0xf]
    %v45 = vld [vmem:[%s0 + $0x10] sm:$0xf]
    %v46 = vld [vmem:[%s0 + $0x14] sm:$0xf]
    %v47 = vld [vmem:[%s0 + $0x18] sm:$0xf]
    %v48 = vld [vmem:[%s0 + $0x1c] sm:$0xf]
    %v49 = vld [vmem:[%s1] sm:$0xf]
    %v50 = vld [vmem:[%s1 + $0x4] sm:$0xf]
    %v51 = vld [vmem:[%s1 + $0x8] sm:$0xf]
    %v52 = vld [vmem:[%s1 + $0xc] sm:$0xf]
    %v53 = vld [vmem:[%s1 + $0x10] sm:$0xf]
    %v54 = vld [vmem:[%s1 + $0x14] sm:$0xf]
    %v55 = vld [vmem:[%s1 + $0x18] sm:$0xf]
    %v56 = vld [vmem:[%s1 + $0x1c] sm:$0xf]
    %v57 = vld [vmem:[%s1 + $0x20] sm:$0xf]
    %v58 = vld [vmem:[%s1 + $0x24] sm:$0xf]
    %v59 = vld [vmem:[%s1 + $0x28] sm:$0xf]
    %v60 = vld [vmem:[%s1 + $0x2c] sm:$0xf]
    %v61 = vld [vmem:[%s1 + $0x30] sm:$0xf]
    %v62 = vld [vmem:[%s1 + $0x34] sm:$0xf]
    %v63 = vld [vmem:[%s1 + $0x38] sm:$0xf]
    %v64 = vld [vmem:[%s1 + $0x3c] sm:$0xf]
    %v65 = vld [vmem:[%s1 + $0x40] sm:$0xf]
    %v66 = vld [vmem:[%s1 + $0x44] sm:$0xf]
    %v67 = vld [vmem:[%s1 + $0x48] sm:$0xf]
    %v68 = vld [vmem:[%s1 + $0x4c] sm:$0xf]
    %v69 = vld [vmem:[%s1 + $0x50] sm:$0xf]
    %v70 = vld [vmem:[%s1 + $0x54] sm:$0xf]
    %v71 = vld [vmem:[%s1 + $0x58] sm:$0xf]
    %v72 = vld [vmem:[%s1 + $0x5c] sm:$0xf]
    %v73 = vld [vmem:[%s1 + $0x60] sm:$0xf]
    %v74 = vld [vmem:[%s1 + $0x64] sm:$0xf]
    %v75 = vld [vmem:[%s1 + $0x68] sm:$0xf]
    %v76 = vld [vmem:[%s1 + $0x6c] sm:$0xf]
    %v77 = vld [vmem:[%s1 + $0x70] sm:$0xf]
    %v78 = vld [vmem:[%s1 + $0x74] sm:$0xf]
    %v79 = vld [vmem:[%s1 + $0x78] sm:$0xf]
    %v80 = vld [vmem:[%s1 + $0x7c] sm:$0xf]
    %v81 = vld [vmem:[%s2] sm:$0xff]
    %v82 = vld [vmem:[%s2 + $0x8] sm:$0xff]
    %v83 = vld [vmem:[%s2 + $0x10] sm:$0xff]
    %v84 = vld [vmem:[%s2 + $0x18] sm:$0xff]
    %v85 = vld [vmem:[%s2 + $0x20] sm:$0xff]
    %v86 = vld [vmem:[%s2 + $0x28] sm:$0xff]
    %v87 = vld [vmem:[%s2 + $0x30] sm:$0xff]
    %v88 = vld [vmem:[%s2 + $0x38] sm:$0xff]
    %v89 = vld [vmem:[%s2 + $0x40] sm:$0xff]
    %v90 = vld [vmem:[%s2 + $0x48] sm:$0xff]
    %v91 = vld [vmem:[%s2 + $0x50] sm:$0xff]
    %v92 = vld [vmem:[%s2 + $0x58] sm:$0xff]
    %v93 = vld [vmem:[%s2 + $0x60] sm:$0xff]
    %v94 = vld [vmem:[%s2 + $0x68] sm:$0xff]
    %v95 = vld [vmem:[%s2 + $0x70] sm:$0xff]
    %v96 = vld [vmem:[%s2 + $0x78] sm:$0xff]
    %v97 = vld [vmem:[%s2 + $0x80] sm:$0xff]
    %v98 = vld [vmem:[%s2 + $0x88] sm:$0xff]
    %v99 = vld [vmem:[%s2 + $0x90] sm:$0xff]
    %v100 = vld [vmem:[%s2 + $0x98] sm:$0xff]
    %v101 = vld [vmem:[%s2 + $0xa0] sm:$0xff]
    %v102 = vld [vmem:[%s2 + $0xa8] sm:$0xff]
    %v103 = vld [vmem:[%s2 + $0xb0] sm:$0xff]
    %v104 = vld [vmem:[%s2 + $0xb8] sm:$0xff]
    %v105 = vld [vmem:[%s2 + $0xc0] sm:$0xff]
    %v106 = vld [vmem:[%s2 + $0xc8] sm:$0xff]
    %v107 = vld [vmem:[%s2 + $0xd0] sm:$0xff]
    %v108 = vld [vmem:[%s2 + $0xd8] sm:$0xff]
    %v109 = vld [vmem:[%s2 + $0xe0] sm:$0xff]
    %v110 = vld [vmem:[%s2 + $0xe8] sm:$0xff]
    %v111 = vld [vmem:[%s2 + $0xf0] sm:$0xff]
    %v112 = vld [vmem:[%s2 + $0xf8] sm:$0xff]
    %114 = vset.pattern.permute.xlu0 0
    %115 = vperm.xlu0 %114, %v81
    %v116 = vpop.permute.xlu0 %115
    %119 = vset.pattern.permute.xlu0 0
    %120 = vperm.xlu0 %119, %v82
    %v121 = vpop.permute.xlu0 %120
    %124 = vset.pattern.permute.xlu0 0
    %125 = vperm.xlu0 %124, %v83
    %v126 = vpop.permute.xlu0 %125
    %129 = vset.pattern.permute.xlu0 0
    %130 = vperm.xlu0 %129, %v84
    %v131 = vpop.permute.xlu0 %130
    %134 = vset.pattern.permute.xlu0 0
    %135 = vperm.xlu0 %134, %v85
    %v136 = vpop.permute.xlu0 %135
    %139 = vset.pattern.permute.xlu0 0
    %140 = vperm.xlu0 %139, %v86
    %v141 = vpop.permute.xlu0 %140
    %144 = vset.pattern.permute.xlu0 0
    %145 = vperm.xlu0 %144, %v87
    %v146 = vpop.permute.xlu0 %145
    %149 = vset.pattern.permute.xlu0 0
    %150 = vperm.xlu0 %149, %v88
    %v151 = vpop.permute.xlu0 %150
    %154 = vset.pattern.permute.xlu0 0
    %155 = vperm.xlu0 %154, %v89
    %v156 = vpop.permute.xlu0 %155
    %159 = vset.pattern.permute.xlu0 0
    %160 = vperm.xlu0 %159, %v90
    %v161 = vpop.permute.xlu0 %160
    %164 = vset.pattern.permute.xlu0 0
    %165 = vperm.xlu0 %164, %v91
    %v166 = vpop.permute.xlu0 %165
    %169 = vset.pattern.permute.xlu0 0
    %170 = vperm.xlu0 %169, %v92
    %v171 = vpop.permute.xlu0 %170
    %174 = vset.pattern.permute.xlu0 0
    %175 = vperm.xlu0 %174, %v93
    %v176 = vpop.permute.xlu0 %175
    %179 = vset.pattern.permute.xlu0 0
    %180 = vperm.xlu0 %179, %v94
    %v181 = vpop.permute.xlu0 %180
    %184 = vset.pattern.permute.xlu0 0
    %185 = vperm.xlu0 %184, %v95
    %v186 = vpop.permute.xlu0 %185
    %189 = vset.pattern.permute.xlu0 0
    %190 = vperm.xlu0 %189, %v96
    %v191 = vpop.permute.xlu0 %190
    %194 = vset.pattern.permute.xlu0 0
    %195 = vperm.xlu0 %194, %v97
    %v196 = vpop.permute.xlu0 %195
    %199 = vset.pattern.permute.xlu0 0
    %200 = vperm.xlu0 %199, %v98
    %v201 = vpop.permute.xlu0 %200
    %204 = vset.pattern.permute.xlu0 0
    %205 = vperm.xlu0 %204, %v99
    %v206 = vpop.permute.xlu0 %205
    %209 = vset.pattern.permute.xlu0 0
    %210 = vperm.xlu0 %209, %v100
    %v211 = vpop.permute.xlu0 %210
    %214 = vset.pattern.permute.xlu0 0
    %215 = vperm.xlu0 %214, %v101
    %v216 = vpop.permute.xlu0 %215
    %219 = vset.pattern.permute.xlu0 0
    %220 = vperm.xlu0 %219, %v102
    %v221 = vpop.permute.xlu0 %220
    %224 = vset.pattern.permute.xlu0 0
    %225 = vperm.xlu0 %224, %v103
    %v226 = vpop.permute.xlu0 %225
    %229 = vset.pattern.permute.xlu0 0
    %230 = vperm.xlu0 %229, %v104
    %v231 = vpop.permute.xlu0 %230
    %234 = vset.pattern.permute.xlu0 0
    %235 = vperm.xlu0 %234, %v105
    %v236 = vpop.permute.xlu0 %235
    %239 = vset.pattern.permute.xlu0 0
    %240 = vperm.xlu0 %239, %v106
    %v241 = vpop.permute.xlu0 %240
    %244 = vset.pattern.permute.xlu0 0
    %245 = vperm.xlu0 %244, %v107
    %v246 = vpop.permute.xlu0 %245
    %249 = vset.pattern.permute.xlu0 0
    %250 = vperm.xlu0 %249, %v108
    %v251 = vpop.permute.xlu0 %250
    %254 = vset.pattern.permute.xlu0 0
    %255 = vperm.xlu0 %254, %v109
    %v256 = vpop.permute.xlu0 %255
    %259 = vset.pattern.permute.xlu0 0
    %260 = vperm.xlu0 %259, %v110
    %v261 = vpop.permute.xlu0 %260
    %264 = vset.pattern.permute.xlu0 0
    %265 = vperm.xlu0 %264, %v111
    %v266 = vpop.permute.xlu0 %265
    %269 = vset.pattern.permute.xlu0 0
    %270 = vperm.xlu0 %269, %v112
    %v271 = vpop.permute.xlu0 %270
    %v305 = vunpack.c.l.b16 %v49
    %v306 = vunpack.c.l.b16 %v50
    %v307 = vunpack.c.l.b16 %v51
    %v308 = vunpack.c.l.b16 %v52
    %v309 = vunpack.c.l.b16 %v53
    %v310 = vunpack.c.l.b16 %v54
    %v311 = vunpack.c.l.b16 %v55
    %v312 = vunpack.c.l.b16 %v56
    %v313 = vunpack.c.l.b16 %v57
    %v314 = vunpack.c.l.b16 %v58
    %v315 = vunpack.c.l.b16 %v59
    %v316 = vunpack.c.l.b16 %v60
    %v317 = vunpack.c.l.b16 %v61
    %v318 = vunpack.c.l.b16 %v62
    %v319 = vunpack.c.l.b16 %v63
    %v320 = vunpack.c.l.b16 %v64
    %v321 = vunpack.c.l.b16 %v65
    %v322 = vunpack.c.l.b16 %v66
    %v323 = vunpack.c.l.b16 %v67
    %v324 = vunpack.c.l.b16 %v68
    %v325 = vunpack.c.l.b16 %v69
    %v326 = vunpack.c.l.b16 %v70
    %v327 = vunpack.c.l.b16 %v71
    %v328 = vunpack.c.l.b16 %v72
    %v329 = vunpack.c.l.b16 %v73
    %v330 = vunpack.c.l.b16 %v74
    %v331 = vunpack.c.l.b16 %v75
    %v332 = vunpack.c.l.b16 %v76
    %v333 = vunpack.c.l.b16 %v77
    %v334 = vunpack.c.l.b16 %v78
    %v335 = vunpack.c.l.b16 %v79
    %v336 = vunpack.c.l.b16 %v80
    %v337 = vpack.c.b16 %v306, %v305
    %v338 = vpack.c.b16 %v308, %v307
    %v339 = vpack.c.b16 %v310, %v309
    %v340 = vpack.c.b16 %v312, %v311
    %v341 = vpack.c.b16 %v314, %v313
    %v342 = vpack.c.b16 %v316, %v315
    %v343 = vpack.c.b16 %v318, %v317
    %v344 = vpack.c.b16 %v320, %v319
    %v345 = vpack.c.b16 %v322, %v321
    %v346 = vpack.c.b16 %v324, %v323
    %v347 = vpack.c.b16 %v326, %v325
    %v348 = vpack.c.b16 %v328, %v327
    %v349 = vpack.c.b16 %v330, %v329
    %v350 = vpack.c.b16 %v332, %v331
    %v351 = vpack.c.b16 %v334, %v333
    %v352 = vpack.c.b16 %v336, %v335
    %v361 = vunpack.c.l.b16 %v41
    %v362 = vunpack.c.l.b16 %v42
    %v363 = vunpack.c.l.b16 %v43
    %v364 = vunpack.c.l.b16 %v44
    %v365 = vunpack.c.l.b16 %v45
    %v366 = vunpack.c.l.b16 %v46
    %v367 = vunpack.c.l.b16 %v47
    %v368 = vunpack.c.l.b16 %v48
    %v369 = vpack.c.b16 %v362, %v361
    %v370 = vpack.c.b16 %v364, %v363
    %v371 = vpack.c.b16 %v366, %v365
    %v372 = vpack.c.b16 %v368, %v367
    %vm377 = vcmask 523264
    %v379 = vsel %vm377, %v337, 0
    %v382 = vsel %vm377, %v338, 0
    %v385 = vsel %vm377, %v339, 0
    %v388 = vsel %vm377, %v340, 0
    %v391 = vsel %vm377, %v341, 0
    %v394 = vsel %vm377, %v342, 0
    %v397 = vsel %vm377, %v343, 0
    %v400 = vsel %vm377, %v344, 0
    %v403 = vsel %vm377, %v345, 0
    %v406 = vsel %vm377, %v346, 0
    %v409 = vsel %vm377, %v347, 0
    %v412 = vsel %vm377, %v348, 0
    %v415 = vsel %vm377, %v349, 0
    %v418 = vsel %vm377, %v350, 0
    %v421 = vsel %vm377, %v351, 0
    %v424 = vsel %vm377, %v352, 0
    %426 = vmatprep.subr.bf16.mxu0 0
    %427 = vmatpush1.bf16.msra.mxu0 %v369
    %428 = vmatprep.subr.bf16.mxu0 0
    %429 = vmatpush1.bf16.msra.mxu0 %v370
    %430 = vmatprep.subr.bf16.mxu0 0
    %431 = vmatpush1.bf16.msra.mxu0 %v371
    %432 = vmatprep.subr.bf16.mxu0 0
    %433 = vmatpush1.bf16.msra.mxu0 %v372
    %434 = vmatprep.subr.bf16.mxu0 0
    %435 = vmatpush1.bf16.msra.mxu0 0
    %436 = vmatprep.subr.bf16.mxu0 0
    %437 = vmatpush1.bf16.msra.mxu0 0
    %438 = vmatprep.subr.bf16.mxu0 0
    %439 = vmatpush1.bf16.msra.mxu0 0
    %440 = vmatprep.subr.bf16.mxu0 0
    %441 = vmatpush1.bf16.msra.mxu0 0
    %442 = vmatprep.subr.bf16.mxu0 0
    %443 = vmatpush1.bf16.msra.mxu0 0
    %444 = vmatprep.subr.bf16.mxu0 0
    %445 = vmatpush1.bf16.msra.mxu0 0
    %446 = vmatprep.subr.bf16.mxu0 0
    %447 = vmatpush1.bf16.msra.mxu0 0
    %448 = vmatprep.subr.bf16.mxu0 0
    %449 = vmatpush1.bf16.msra.mxu0 0
    %450 = vmatprep.subr.bf16.mxu0 0
    %451 = vmatpush1.bf16.msra.mxu0 0
    %452 = vmatprep.subr.bf16.mxu0 0
    %453 = vmatpush1.bf16.msra.mxu0 0
    %454 = vmatprep.subr.bf16.mxu0 0
    %455 = vmatpush1.bf16.msra.mxu0 0
    %456 = vmatprep.subr.bf16.mxu0 0
    %457 = vmatpush1.bf16.msra.mxu0 0
    %458 = vmatprep.mubr.bf16.mxu0 0
    %459 = vmatmul.mubr.bf16.gmra.mrb[0].mxu0 %v379
    %v460 = vpop.f32.mrb[0].mxu0
    %v461 = vadd.f32 %v116, %v460
    %v462 = vpop.f32.mrb[0].mxu0
    %v463 = vpop.f32.mrb[0].mxu0
    %v464 = vadd.f32 %v121, %v463
    %v465 = vpop.f32.mrb[0].mxu0
    %466 = vmatprep.mubr.bf16.mxu0 0
    %467 = vmatmul.mubr.bf16.gmra.mrb[0].mxu0 %v382
    %v468 = vpop.f32.mrb[0].mxu0
    %v469 = vadd.f32 %v126, %v468
    %v470 = vpop.f32.mrb[0].mxu0
    %v471 = vpop.f32.mrb[0].mxu0
    %v472 = vadd.f32 %v131, %v471
    %v473 = vpop.f32.mrb[0].mxu0
    %474 = vmatprep.mubr.bf16.mxu0 0
    %475 = vmatmul.mubr.bf16.gmra.mrb[0].mxu0 %v385
    %v476 = vpop.f32.mrb[0].mxu0
    %v477 = vadd.f32 %v136, %v476
    %v478 = vpop.f32.mrb[0].mxu0
    %v479 = vpop.f32.mrb[0].mxu0
    %v480 = vadd.f32 %v141, %v479
    %v481 = vpop.f32.mrb[0].mxu0
    %482 = vmatprep.mubr.bf16.mxu0 0
    %483 = vmatmul.mubr.bf16.gmra.mrb[0].mxu0 %v388
    %v484 = vpop.f32.mrb[0].mxu0
    %v485 = vadd.f32 %v146, %v484
    %v486 = vpop.f32.mrb[0].mxu0
    %v487 = vpop.f32.mrb[0].mxu0
    %v488 = vadd.f32 %v151, %v487
    %v489 = vpop.f32.mrb[0].mxu0
    %490 = vmatprep.mubr.bf16.mxu0 0
    %491 = vmatmul.mubr.bf16.gmra.mrb[0].mxu0 %v391
    %v492 = vpop.f32.mrb[0].mxu0
    %v493 = vadd.f32 %v156, %v492
    %v494 = vpop.f32.mrb[0].mxu0
    %v495 = vpop.f32.mrb[0].mxu0
    %v496 = vadd.f32 %v161, %v495
    %v497 = vpop.f32.mrb[0].mxu0
    %498 = vmatprep.mubr.bf16.mxu0 0
    %499 = vmatmul.mubr.bf16.gmra.mrb[0].mxu0 %v394
    %v500 = vpop.f32.mrb[0].mxu0
    %v501 = vadd.f32 %v166, %v500
    %v502 = vpop.f32.mrb[0].mxu0
    %v503 = vpop.f32.mrb[0].mxu0
    %v504 = vadd.f32 %v171, %v503
    %v505 = vpop.f32.mrb[0].mxu0
    %506 = vmatprep.mubr.bf16.mxu0 0
    %507 = vmatmul.mubr.bf16.gmra.mrb[0].mxu0 %v397
    %v508 = vpop.f32.mrb[0].mxu0
    %v509 = vadd.f32 %v176, %v508
    %v510 = vpop.f32.mrb[0].mxu0
    %v511 = vpop.f32.mrb[0].mxu0
    %v512 = vadd.f32 %v181, %v511
    %v513 = vpop.f32.mrb[0].mxu0
    %514 = vmatprep.mubr.bf16.mxu0 0
    %515 = vmatmul.mubr.bf16.gmra.mrb[0].mxu0 %v400
    %v516 = vpop.f32.mrb[0].mxu0
    %v517 = vadd.f32 %v186, %v516
    %v518 = vpop.f32.mrb[0].mxu0
    %v519 = vpop.f32.mrb[0].mxu0
    %v520 = vadd.f32 %v191, %v519
    %v521 = vpop.f32.mrb[0].mxu0
    %522 = vmatprep.mubr.bf16.mxu0 0
    %523 = vmatmul.mubr.bf16.gmra.mrb[0].mxu0 %v403
    %v524 = vpop.f32.mrb[0].mxu0
    %v525 = vadd.f32 %v196, %v524
    %v526 = vpop.f32.mrb[0].mxu0
    %v527 = vpop.f32.mrb[0].mxu0
    %v528 = vadd.f32 %v201, %v527
    %v529 = vpop.f32.mrb[0].mxu0
    %530 = vmatprep.mubr.bf16.mxu0 0
    %531 = vmatmul.mubr.bf16.gmra.mrb[0].mxu0 %v406
    %v532 = vpop.f32.mrb[0].mxu0
    %v533 = vadd.f32 %v206, %v532
    %v534 = vpop.f32.mrb[0].mxu0
    %v535 = vpop.f32.mrb[0].mxu0
    %v536 = vadd.f32 %v211, %v535
    %v537 = vpop.f32.mrb[0].mxu0
    %538 = vmatprep.mubr.bf16.mxu0 0
    %539 = vmatmul.mubr.bf16.gmra.mrb[0].mxu0 %v409
    %v540 = vpop.f32.mrb[0].mxu0
    %v541 = vadd.f32 %v216, %v540
    %v542 = vpop.f32.mrb[0].mxu0
    %v543 = vpop.f32.mrb[0].mxu0
    %v544 = vadd.f32 %v221, %v543
    %v545 = vpop.f32.mrb[0].mxu0
    %546 = vmatprep.mubr.bf16.mxu0 0
    %547 = vmatmul.mubr.bf16.gmra.mrb[0].mxu0 %v412
    %v548 = vpop.f32.mrb[0].mxu0
    %v549 = vadd.f32 %v226, %v548
    %v550 = vpop.f32.mrb[0].mxu0
    %v551 = vpop.f32.mrb[0].mxu0
    %v552 = vadd.f32 %v231, %v551
    %v553 = vpop.f32.mrb[0].mxu0
    %554 = vmatprep.mubr.bf16.mxu0 0
    %555 = vmatmul.mubr.bf16.gmra.mrb[0].mxu0 %v415
    %v556 = vpop.f32.mrb[0].mxu0
    %v557 = vadd.f32 %v236, %v556
    %v558 = vpop.f32.mrb[0].mxu0
    %v559 = vpop.f32.mrb[0].mxu0
    %v560 = vadd.f32 %v241, %v559
    %v561 = vpop.f32.mrb[0].mxu0
    %562 = vmatprep.mubr.bf16.mxu0 0
    %563 = vmatmul.mubr.bf16.gmra.mrb[0].mxu0 %v418
    %v564 = vpop.f32.mrb[0].mxu0
    %v565 = vadd.f32 %v246, %v564
    %v566 = vpop.f32.mrb[0].mxu0
    %v567 = vpop.f32.mrb[0].mxu0
    %v568 = vadd.f32 %v251, %v567
    %v569 = vpop.f32.mrb[0].mxu0
    %570 = vmatprep.mubr.bf16.mxu0 0
    %571 = vmatmul.mubr.bf16.gmra.mrb[0].mxu0 %v421
    %v572 = vpop.f32.mrb[0].mxu0
    %v573 = vadd.f32 %v256, %v572
    %v574 = vpop.f32.mrb[0].mxu0
    %v575 = vpop.f32.mrb[0].mxu0
    %v576 = vadd.f32 %v261, %v575
    %v577 = vpop.f32.mrb[0].mxu0
    %578 = vmatprep.mubr.bf16.mxu0 0
    %579 = vmatmul.mubr.bf16.gmra.mrb[0].mxu0 %v424
    %v580 = vpop.f32.mrb[0].mxu0
    %v581 = vadd.f32 %v266, %v580
    %v582 = vpop.f32.mrb[0].mxu0
    %v583 = vpop.f32.mrb[0].mxu0
    %v584 = vadd.f32 %v271, %v583
    %v585 = vpop.f32.mrb[0].mxu0
    %586 = vdwg.mxu0
    %v587 = vmax.f32 %v461, 0.0
    %v588 = vmax.f32 %v464, 0.0
    %v589 = vmax.f32 %v469, 0.0
    %v590 = vmax.f32 %v472, 0.0
    %v591 = vmax.f32 %v477, 0.0
    %v592 = vmax.f32 %v480, 0.0
    %v593 = vmax.f32 %v485, 0.0
    %v594 = vmax.f32 %v488, 0.0
    %v595 = vmax.f32 %v493, 0.0
    %v596 = vmax.f32 %v496, 0.0
    %v597 = vmax.f32 %v501, 0.0
    %v598 = vmax.f32 %v504, 0.0
    %v599 = vmax.f32 %v509, 0.0
    %v600 = vmax.f32 %v512, 0.0
    %v601 = vmax.f32 %v517, 0.0
    %v602 = vmax.f32 %v520, 0.0
    %v603 = vmax.f32 %v525, 0.0
    %v604 = vmax.f32 %v528, 0.0
    %v605 = vmax.f32 %v533, 0.0
    %v606 = vmax.f32 %v536, 0.0
    %v607 = vmax.f32 %v541, 0.0
    %v608 = vmax.f32 %v544, 0.0
    %v609 = vmax.f32 %v549, 0.0
    %v610 = vmax.f32 %v552, 0.0
    %v611 = vmax.f32 %v557, 0.0
    %v612 = vmax.f32 %v560, 0.0
    %v613 = vmax.f32 %v565, 0.0
    %v614 = vmax.f32 %v568, 0.0
    %v615 = vmax.f32 %v573, 0.0
    %v616 = vmax.f32 %v576, 0.0
    %v617 = vmax.f32 %v581, 0.0
    %v618 = vmax.f32 %v584, 0.0
    %v619 = vpack.c.bf16 %v588, %v587
    %v620 = vpack.c.bf16 %v590, %v589
    %v621 = vpack.c.bf16 %v592, %v591
    %v622 = vpack.c.bf16 %v594, %v593
    %v623 = vpack.c.bf16 %v596, %v595
    %v624 = vpack.c.bf16 %v598, %v597
    %v625 = vpack.c.bf16 %v600, %v599
    %v626 = vpack.c.bf16 %v602, %v601
    %v627 = vpack.c.bf16 %v604, %v603
    %v628 = vpack.c.bf16 %v606, %v605
    %v629 = vpack.c.bf16 %v608, %v607
    %v630 = vpack.c.bf16 %v610, %v609
    %v631 = vpack.c.bf16 %v612, %v611
    %v632 = vpack.c.bf16 %v614, %v613
    %v633 = vpack.c.bf16 %v616, %v615
    %v634 = vpack.c.bf16 %v618, %v617
    %v635 = vld [vmem:[%s3] sm:$0xff]
    %v636 = vld [vmem:[%s3 + $0x8] sm:$0xff]
    %v637 = vld [vmem:[%s3 + $0x10] sm:$0xff]
    %v638 = vld [vmem:[%s3 + $0x18] sm:$0xff]
    %v639 = vld [vmem:[%s3 + $0x20] sm:$0xff]
    %v640 = vld [vmem:[%s3 + $0x28] sm:$0xff]
    %v641 = vld [vmem:[%s3 + $0x30] sm:$0xff]
    %v642 = vld [vmem:[%s3 + $0x38] sm:$0xff]
    %v643 = vld [vmem:[%s3 + $0x40] sm:$0xff]
    %v644 = vld [vmem:[%s3 + $0x48] sm:$0xff]
    %v645 = vld [vmem:[%s3 + $0x50] sm:$0xff]
    %v646 = vld [vmem:[%s3 + $0x58] sm:$0xff]
    %v647 = vld [vmem:[%s3 + $0x60] sm:$0xff]
    %v648 = vld [vmem:[%s3 + $0x68] sm:$0xff]
    %v649 = vld [vmem:[%s3 + $0x70] sm:$0xff]
    %v650 = vld [vmem:[%s3 + $0x78] sm:$0xff]
    %v651 = vld [vmem:[%s4] sm:$0xff]
    %v652 = vld [vmem:[%s4 + $0x8] sm:$0xff]
    %v653 = vld [vmem:[%s4 + $0x10] sm:$0xff]
    %v654 = vld [vmem:[%s4 + $0x18] sm:$0xff]
    %v655 = vld [vmem:[%s4 + $0x20] sm:$0xff]
    %v656 = vld [vmem:[%s4 + $0x28] sm:$0xff]
    %v657 = vld [vmem:[%s4 + $0x30] sm:$0xff]
    %v658 = vld [vmem:[%s4 + $0x38] sm:$0xff]
    %v659 = vld [vmem:[%s4 + $0x40] sm:$0xff]
    %v660 = vld [vmem:[%s4 + $0x48] sm:$0xff]
    %v661 = vld [vmem:[%s4 + $0x50] sm:$0xff]
    %v662 = vld [vmem:[%s4 + $0x58] sm:$0xff]
    %v663 = vld [vmem:[%s4 + $0x60] sm:$0xff]
    %v664 = vld [vmem:[%s4 + $0x68] sm:$0xff]
    %v665 = vld [vmem:[%s4 + $0x70] sm:$0xff]
    %v666 = vld [vmem:[%s4 + $0x78] sm:$0xff]
    %668 = vset.pattern.permute.xlu0 0
    %669 = vperm.xlu0 %668, %v651
    %v670 = vpop.permute.xlu0 %669
    %673 = vset.pattern.permute.xlu0 0
    %674 = vperm.xlu0 %673, %v652
    %v675 = vpop.permute.xlu0 %674
    %678 = vset.pattern.permute.xlu0 0
    %679 = vperm.xlu0 %678, %v653
    %v680 = vpop.permute.xlu0 %679
    %683 = vset.pattern.permute.xlu0 0
    %684 = vperm.xlu0 %683, %v654
    %v685 = vpop.permute.xlu0 %684
    %688 = vset.pattern.permute.xlu0 0
    %689 = vperm.xlu0 %688, %v655
    %v690 = vpop.permute.xlu0 %689
    %693 = vset.pattern.permute.xlu0 0
    %694 = vperm.xlu0 %693, %v656
    %v695 = vpop.permute.xlu0 %694
    %698 = vset.pattern.permute.xlu0 0
    %699 = vperm.xlu0 %698, %v657
    %v700 = vpop.permute.xlu0 %699
    %703 = vset.pattern.permute.xlu0 0
    %704 = vperm.xlu0 %703, %v658
    %v705 = vpop.permute.xlu0 %704
    %708 = vset.pattern.permute.xlu0 0
    %709 = vperm.xlu0 %708, %v659
    %v710 = vpop.permute.xlu0 %709
    %713 = vset.pattern.permute.xlu0 0
    %714 = vperm.xlu0 %713, %v660
    %v715 = vpop.permute.xlu0 %714
    %718 = vset.pattern.permute.xlu0 0
    %719 = vperm.xlu0 %718, %v661
    %v720 = vpop.permute.xlu0 %719
    %723 = vset.pattern.permute.xlu0 0
    %724 = vperm.xlu0 %723, %v662
    %v725 = vpop.permute.xlu0 %724
    %728 = vset.pattern.permute.xlu0 0
    %729 = vperm.xlu0 %728, %v663
    %v730 = vpop.permute.xlu0 %729
    %733 = vset.pattern.permute.xlu0 0
    %734 = vperm.xlu0 %733, %v664
    %v735 = vpop.permute.xlu0 %734
    %738 = vset.pattern.permute.xlu0 0
    %739 = vperm.xlu0 %738, %v665
    %v740 = vpop.permute.xlu0 %739
    %743 = vset.pattern.permute.xlu0 0
    %744 = vperm.xlu0 %743, %v666
    %v745 = vpop.permute.xlu0 %744
    %v763 = vunpack.c.l.b16 %v635
    %v764 = vunpack.c.h.b16 %v635
    %v765 = vunpack.c.l.b16 %v636
    %v766 = vunpack.c.h.b16 %v636
    %v767 = vunpack.c.l.b16 %v637
    %v768 = vunpack.c.h.b16 %v637
    %v769 = vunpack.c.l.b16 %v638
    %v770 = vunpack.c.h.b16 %v638
    %v771 = vunpack.c.l.b16 %v639
    %v772 = vunpack.c.h.b16 %v639
    %v773 = vunpack.c.l.b16 %v640
    %v774 = vunpack.c.h.b16 %v640
    %v775 = vunpack.c.l.b16 %v641
    %v776 = vunpack.c.h.b16 %v641
    %v777 = vunpack.c.l.b16 %v642
    %v778 = vunpack.c.h.b16 %v642
    %v779 = vunpack.c.l.b16 %v643
    %v780 = vunpack.c.h.b16 %v643
    %v781 = vunpack.c.l.b16 %v644
    %v782 = vunpack.c.h.b16 %v644
    %v783 = vunpack.c.l.b16 %v645
    %v784 = vunpack.c.h.b16 %v645
    %v785 = vunpack.c.l.b16 %v646
    %v786 = vunpack.c.h.b16 %v646
    %v787 = vunpack.c.l.b16 %v647
    %v788 = vunpack.c.h.b16 %v647
    %v789 = vunpack.c.l.b16 %v648
    %v790 = vunpack.c.h.b16 %v648
    %v791 = vunpack.c.l.b16 %v649
    %v792 = vunpack.c.h.b16 %v649
    %v793 = vunpack.c.l.b16 %v650
    %v794 = vunpack.c.h.b16 %v650
    %v795 = vpack.c.b16 %v765, %v763
    %v796 = vpack.c.b16 %v766, %v764
    %v797 = vpack.c.b16 %v769, %v767
    %v798 = vpack.c.b16 %v770, %v768
    %v799 = vpack.c.b16 %v773, %v771
    %v800 = vpack.c.b16 %v774, %v772
    %v801 = vpack.c.b16 %v777, %v775
    %v802 = vpack.c.b16 %v778, %v776
    %v803 = vpack.c.b16 %v781, %v779
    %v804 = vpack.c.b16 %v782, %v780
    %v805 = vpack.c.b16 %v785, %v783
    %v806 = vpack.c.b16 %v786, %v784
    %v807 = vpack.c.b16 %v789, %v787
    %v808 = vpack.c.b16 %v790, %v788
    %v809 = vpack.c.b16 %v793, %v791
    %v810 = vpack.c.b16 %v794, %v792
    %827 = vmatprep.subr.bf16.mxu0 0
    %828 = vmatpush1.bf16.msra.mxu0 %v619
    %829 = vmatprep.subr.bf16.mxu0 0
    %830 = vmatpush1.bf16.msra.mxu0 %v620
    %831 = vmatprep.subr.bf16.mxu0 0
    %832 = vmatpush1.bf16.msra.mxu0 %v621
    %833 = vmatprep.subr.bf16.mxu0 0
    %834 = vmatpush1.bf16.msra.mxu0 %v622
    %835 = vmatprep.subr.bf16.mxu0 0
    %836 = vmatpush1.bf16.msra.mxu0 %v623
    %837 = vmatprep.subr.bf16.mxu0 0
    %838 = vmatpush1.bf16.msra.mxu0 %v624
    %839 = vmatprep.subr.bf16.mxu0 0
    %840 = vmatpush1.bf16.msra.mxu0 %v625
    %841 = vmatprep.subr.bf16.mxu0 0
    %842 = vmatpush1.bf16.msra.mxu0 %v626
    %843 = vmatprep.subr.bf16.mxu0 0
    %844 = vmatpush1.bf16.msra.mxu0 %v627
    %845 = vmatprep.subr.bf16.mxu0 0
    %846 = vmatpush1.bf16.msra.mxu0 %v628
    %847 = vmatprep.subr.bf16.mxu0 0
    %848 = vmatpush1.bf16.msra.mxu0 %v629
    %849 = vmatprep.subr.bf16.mxu0 0
    %850 = vmatpush1.bf16.msra.mxu0 %v630
    %851 = vmatprep.subr.bf16.mxu0 0
    %852 = vmatpush1.bf16.msra.mxu0 %v631
    %853 = vmatprep.subr.bf16.mxu0 0
    %854 = vmatpush1.bf16.msra.mxu0 %v632
    %855 = vmatprep.subr.bf16.mxu0 0
    %856 = vmatpush1.bf16.msra.mxu0 %v633
    %857 = vmatprep.subr.bf16.mxu0 0
    %858 = vmatpush1.bf16.msra.mxu0 %v634
    %859 = vmatprep.mubr.bf16.mxu0 %v796
    %860 = vmatmul.mubr.bf16.gmra.mrb[0].mxu0 %v795
    %v861 = vpop.f32.mrb[0].mxu0
    %v862 = vadd.f32 %v670, %v861
    %v863 = vpop.f32.mrb[0].mxu0
    %v864 = vpop.f32.mrb[0].mxu0
    %v865 = vadd.f32 %v675, %v864
    %v866 = vpop.f32.mrb[0].mxu0
    %867 = vmatprep.mubr.bf16.mxu0 %v798
    %868 = vmatmul.mubr.bf16.gmra.mrb[0].mxu0 %v797
    %v869 = vpop.f32.mrb[0].mxu0
    %v870 = vadd.f32 %v680, %v869
    %v871 = vpop.f32.mrb[0].mxu0
    %v872 = vpop.f32.mrb[0].mxu0
    %v873 = vadd.f32 %v685, %v872
    %v874 = vpop.f32.mrb[0].mxu0
    %875 = vmatprep.mubr.bf16.mxu0 %v800
    %876 = vmatmul.mubr.bf16.gmra.mrb[0].mxu0 %v799
    %v877 = vpop.f32.mrb[0].mxu0
    %v878 = vadd.f32 %v690, %v877
    %v879 = vpop.f32.mrb[0].mxu0
    %v880 = vpop.f32.mrb[0].mxu0
    %v881 = vadd.f32 %v695, %v880
    %v882 = vpop.f32.mrb[0].mxu0
    %883 = vmatprep.mubr.bf16.mxu0 %v802
    %884 = vmatmul.mubr.bf16.gmra.mrb[0].mxu0 %v801
    %v885 = vpop.f32.mrb[0].mxu0
    %v886 = vadd.f32 %v700, %v885
    %v887 = vpop.f32.mrb[0].mxu0
    %v888 = vpop.f32.mrb[0].mxu0
    %v889 = vadd.f32 %v705, %v888
    %v890 = vpop.f32.mrb[0].mxu0
    %891 = vmatprep.mubr.bf16.mxu0 %v804
    %892 = vmatmul.mubr.bf16.gmra.mrb[0].mxu0 %v803
    %v893 = vpop.f32.mrb[0].mxu0
    %v894 = vadd.f32 %v710, %v893
    %v895 = vpop.f32.mrb[0].mxu0
    %v896 = vpop.f32.mrb[0].mxu0
    %v897 = vadd.f32 %v715, %v896
    %v898 = vpop.f32.mrb[0].mxu0
    %899 = vmatprep.mubr.bf16.mxu0 %v806
    %900 = vmatmul.mubr.bf16.gmra.mrb[0].mxu0 %v805
    %v901 = vpop.f32.mrb[0].mxu0
    %v902 = vadd.f32 %v720, %v901
    %v903 = vpop.f32.mrb[0].mxu0
    %v904 = vpop.f32.mrb[0].mxu0
    %v905 = vadd.f32 %v725, %v904
    %v906 = vpop.f32.mrb[0].mxu0
    %907 = vmatprep.mubr.bf16.mxu0 %v808
    %908 = vmatmul.mubr.bf16.gmra.mrb[0].mxu0 %v807
    %v909 = vpop.f32.mrb[0].mxu0
    %v910 = vadd.f32 %v730, %v909
    %v911 = vpop.f32.mrb[0].mxu0
    %v912 = vpop.f32.mrb[0].mxu0
    %v913 = vadd.f32 %v735, %v912
    %v914 = vpop.f32.mrb[0].mxu0
    %915 = vmatprep.mubr.bf16.mxu0 %v810
    %916 = vmatmul.mubr.bf16.gmra.mrb[0].mxu0 %v809
    %v917 = vpop.f32.mrb[0].mxu0
    %v918 = vadd.f32 %v740, %v917
    %v919 = vpop.f32.mrb[0].mxu0
    %v920 = vpop.f32.mrb[0].mxu0
    %v921 = vadd.f32 %v745, %v920
    %v922 = vpop.f32.mrb[0].mxu0
    %923 = vdwg.mxu0
    %v924 = vmax.f32 %v862, 0.0
    %v925 = vmax.f32 %v865, 0.0
    %v926 = vmax.f32 %v870, 0.0
    %v927 = vmax.f32 %v873, 0.0
    %v928 = vmax.f32 %v878, 0.0
    %v929 = vmax.f32 %v881, 0.0
    %v930 = vmax.f32 %v886, 0.0
    %v931 = vmax.f32 %v889, 0.0
    %v932 = vmax.f32 %v894, 0.0
    %v933 = vmax.f32 %v897, 0.0
    %v934 = vmax.f32 %v902, 0.0
    %v935 = vmax.f32 %v905, 0.0
    %v936 = vmax.f32 %v910, 0.0
    %v937 = vmax.f32 %v913, 0.0
    %v938 = vmax.f32 %v918, 0.0
    %v939 = vmax.f32 %v921, 0.0
    %v940 = vpack.c.bf16 %v925, %v924
    %v941 = vpack.c.bf16 %v927, %v926
    %v942 = vpack.c.bf16 %v929, %v928
    %v943 = vpack.c.bf16 %v931, %v930
    %v944 = vpack.c.bf16 %v933, %v932
    %v945 = vpack.c.bf16 %v935, %v934
    %v946 = vpack.c.bf16 %v937, %v936
    %v947 = vpack.c.bf16 %v939, %v938
    %v948 = vld [vmem:[%s5] sm:$0xf]
    %v949 = vld [vmem:[%s5 + $0x4] sm:$0xf]
    %v950 = vld [vmem:[%s5 + $0x8] sm:$0xf]
    %v951 = vld [vmem:[%s5 + $0xc] sm:$0xf]
    %v952 = vld [vmem:[%s5 + $0x10] sm:$0xf]
    %v953 = vld [vmem:[%s6] sm:$0xff]
    %v954 = vld [vmem:[%s6 + $0x8] sm:$0xff]
    %v955 = vld [vmem:[%s6 + $0x10] sm:$0xff]
    %v956 = vld [vmem:[%s6 + $0x18] sm:$0xff]
    %v957 = vld [vmem:[%s6 + $0x20] sm:$0xff]
    %959 = vset.pattern.permute.xlu0 0
    %960 = vperm.xlu0 %959, %v953
    %v961 = vpop.permute.xlu0 %960
    %964 = vset.pattern.permute.xlu0 0
    %965 = vperm.xlu0 %964, %v954
    %v966 = vpop.permute.xlu0 %965
    %969 = vset.pattern.permute.xlu0 0
    %970 = vperm.xlu0 %969, %v955
    %v971 = vpop.permute.xlu0 %970
    %974 = vset.pattern.permute.xlu0 0
    %975 = vperm.xlu0 %974, %v956
    %v976 = vpop.permute.xlu0 %975
    %979 = vset.pattern.permute.xlu0 0
    %980 = vperm.xlu0 %979, %v957
    %v981 = vpop.permute.xlu0 %980
    %v988 = vunpack.c.l.b16 %v948
    %v989 = vunpack.c.l.b16 %v949
    %v990 = vunpack.c.l.b16 %v950
    %v991 = vunpack.c.l.b16 %v951
    %v992 = vunpack.c.l.b16 %v952
    %v993 = vpack.c.b16 %v989, %v988
    %v994 = vpack.c.b16 %v991, %v990
    %v995 = vpack.c.b16 %v992, %v992
    %999 = vmatprep.subr.bf16.mxu0 0
    %1000 = vmatpush1.bf16.msra.mxu0 %v940
    %1001 = vmatprep.subr.bf16.mxu0 0
    %1002 = vmatpush1.bf16.msra.mxu0 %v941
    %1003 = vmatprep.subr.bf16.mxu0 0
    %1004 = vmatpush1.bf16.msra.mxu0 %v942
    %1005 = vmatprep.subr.bf16.mxu0 0
    %1006 = vmatpush1.bf16.msra.mxu0 %v943
    %1007 = vmatprep.subr.bf16.mxu0 0
    %1008 = vmatpush1.bf16.msra.mxu0 %v944
    %1009 = vmatprep.subr.bf16.mxu0 0
    %1010 = vmatpush1.bf16.msra.mxu0 %v945
    %1011 = vmatprep.subr.bf16.mxu0 0
    %1012 = vmatpush1.bf16.msra.mxu0 %v946
    %1013 = vmatprep.subr.bf16.mxu0 0
    %1014 = vmatpush1.bf16.msra.mxu0 %v947
    %1015 = vmatprep.subr.bf16.mxu0 0
    %1016 = vmatpush1.bf16.msra.mxu0 0
    %1017 = vmatprep.subr.bf16.mxu0 0
    %1018 = vmatpush1.bf16.msra.mxu0 0
    %1019 = vmatprep.subr.bf16.mxu0 0
    %1020 = vmatpush1.bf16.msra.mxu0 0
    %1021 = vmatprep.subr.bf16.mxu0 0
    %1022 = vmatpush1.bf16.msra.mxu0 0
    %1023 = vmatprep.subr.bf16.mxu0 0
    %1024 = vmatpush1.bf16.msra.mxu0 0
    %1025 = vmatprep.subr.bf16.mxu0 0
    %1026 = vmatpush1.bf16.msra.mxu0 0
    %1027 = vmatprep.subr.bf16.mxu0 0
    %1028 = vmatpush1.bf16.msra.mxu0 0
    %1029 = vmatprep.subr.bf16.mxu0 0
    %1030 = vmatpush1.bf16.msra.mxu0 0
    %1031 = vmatprep.mubr.bf16.mxu0 0
    %1032 = vmatmul.mubr.bf16.gmra.mrb[0].mxu0 %v993
    %v1033 = vpop.f32.mrb[0].mxu0
    %v1034 = vadd.f32 %v961, %v1033
    %v1035 = vpop.f32.mrb[0].mxu0
    %v1036 = vpop.f32.mrb[0].mxu0
    %v1037 = vadd.f32 %v966, %v1036
    %v1038 = vpop.f32.mrb[0].mxu0
    %1039 = vmatprep.mubr.bf16.mxu0 0
    %1040 = vmatmul.mubr.bf16.gmra.mrb[0].mxu0 %v994
    %v1041 = vpop.f32.mrb[0].mxu0
    %v1042 = vadd.f32 %v971, %v1041
    %v1043 = vpop.f32.mrb[0].mxu0
    %v1044 = vpop.f32.mrb[0].mxu0
    %v1045 = vadd.f32 %v976, %v1044
    %v1046 = vpop.f32.mrb[0].mxu0
    %1047 = vmatprep.mubr.bf16.mxu0 0
    %1048 = vmatmul.mubr.bf16.gmra.mrb[0].mxu0 %v995
    %v1049 = vpop.f32.mrb[0].mxu0
    %v1050 = vadd.f32 %v981, %v1049
    %v1051 = vpop.f32.mrb[0].mxu0
    %v1052 = vpop.f32.mrb[0].mxu0
    %v1053 = vpop.f32.mrb[0].mxu0
    %1054 = vdwg.mxu0
    %v1055 = vmax.f32 %v1034, 0.0
    %v1056 = vmax.f32 %v1037, 0.0
    %v1057 = vmax.f32 %v1042, 0.0
    %v1058 = vmax.f32 %v1045, 0.0
    %v1059 = vmax.f32 %v1050, 0.0
    %v1060 = vpack.c.bf16 %v1056, %v1055
    %v1061 = vpack.c.bf16 %v1058, %v1057
    %v1062 = vpack.c.bf16 %v1059, %v1059
    %v1063 = vld [vmem:[%s7] sm:$0xf]
    %v1064 = vld [vmem:[%s7 + $0x4] sm:$0xf]
    %v1065 = vld [vmem:[%s8] sm:$0xff]
    %v1066 = vld [vmem:[%s8 + $0x8] sm:$0xff]
    %1068 = vset.pattern.permute.xlu0 0
    %1069 = vperm.xlu0 %1068, %v1065
    %v1070 = vpop.permute.xlu0 %1069
    %1073 = vset.pattern.permute.xlu0 0
    %1074 = vperm.xlu0 %1073, %v1066
    %v1075 = vpop.permute.xlu0 %1074
    %v1079 = vunpack.c.l.b16 %v1063
    %v1080 = vunpack.c.l.b16 %v1064
    %v1081 = vpack.c.b16 %v1080, %v1079
    %vm1082 = vcmask 326656
    %v1084 = vsel %vm1082, %v1081, 0
    %vm1086 = vcmask 1043456
    %v1088 = vsel %vm1086, %v1062, 0
    %1090 = vmatprep.subr.bf16.mxu0 0
    %1091 = vmatpush1.bf16.msra.mxu0 %v1060
    %1092 = vmatprep.subr.bf16.mxu0 0
    %1093 = vmatpush1.bf16.msra.mxu0 %v1061
    %1094 = vmatprep.subr.bf16.mxu0 0
    %1095 = vmatpush1.bf16.msra.mxu0 %v1088
    %1096 = vmatprep.subr.bf16.mxu0 0
    %1097 = vmatpush1.bf16.msra.mxu0 0
    %1098 = vmatprep.subr.bf16.mxu0 0
    %1099 = vmatpush1.bf16.msra.mxu0 0
    %1100 = vmatprep.subr.bf16.mxu0 0
    %1101 = vmatpush1.bf16.msra.mxu0 0
    %1102 = vmatprep.subr.bf16.mxu0 0
    %1103 = vmatpush1.bf16.msra.mxu0 0
    %1104 = vmatprep.subr.bf16.mxu0 0
    %1105 = vmatpush1.bf16.msra.mxu0 0
    %1106 = vmatprep.subr.bf16.mxu0 0
    %1107 = vmatpush1.bf16.msra.mxu0 0
    %1108 = vmatprep.subr.bf16.mxu0 0
    %1109 = vmatpush1.bf16.msra.mxu0 0
    %1110 = vmatprep.subr.bf16.mxu0 0
    %1111 = vmatpush1.bf16.msra.mxu0 0
    %1112 = vmatprep.subr.bf16.mxu0 0
    %1113 = vmatpush1.bf16.msra.mxu0 0
    %1114 = vmatprep.subr.bf16.mxu0 0
    %1115 = vmatpush1.bf16.msra.mxu0 0
    %1116 = vmatprep.subr.bf16.mxu0 0
    %1117 = vmatpush1.bf16.msra.mxu0 0
    %1118 = vmatprep.subr.bf16.mxu0 0
    %1119 = vmatpush1.bf16.msra.mxu0 0
    %1120 = vmatprep.subr.bf16.mxu0 0
    %1121 = vmatpush1.bf16.msra.mxu0 0
    %1122 = vmatprep.mubr.bf16.mxu0 0
    %1123 = vmatmul.mubr.bf16.gmra.mrb[0].mxu0 %v1084
    %v1124 = vpop.f32.mrb[0].mxu0
    %v1125 = vadd.f32 %v1070, %v1124
    %v1126 = vpop.f32.mrb[0].mxu0
    %v1127 = vpop.f32.mrb[0].mxu0
    %v1128 = vadd.f32 %v1075, %v1127
    %v1129 = vpop.f32.mrb[0].mxu0
    %1130 = vdwg.mxu0
    %v1131 = vmax.f32 %v1125, 0.0
    %v1132 = vmax.f32 %v1128, 0.0
    %v1133 = vpack.c.bf16 %v1132, %v1131
    %v1134 = vld [vmem:[%s9] sm:$0x1]
    %s1135 = sld [smem:[#allocation2]]
    %v1136 = vstv %s1135
    %vm1137 = vcmask 130048
    %v1139 = vsel %vm1137, %v1134, 0
    %1141 = vmatprep.subr.bf16.mxu0 0
    %1142 = vmatpush1.bf16.msra.mxu0 %v1133
    %1143 = vmatprep.subr.bf16.mxu0 0
    %1144 = vmatpush1.bf16.msra.mxu0 0
    %1145 = vmatprep.subr.bf16.mxu0 0
    %1146 = vmatpush1.bf16.msra.mxu0 0
    %1147 = vmatprep.subr.bf16.mxu0 0
    %1148 = vmatpush1.bf16.msra.mxu0 0
    %1149 = vmatprep.subr.bf16.mxu0 0
    %1150 = vmatpush1.bf16.msra.mxu0 0
    %1151 = vmatprep.subr.bf16.mxu0 0
    %1152 = vmatpush1.bf16.msra.mxu0 0
    %1153 = vmatprep.subr.bf16.mxu0 0
    %1154 = vmatpush1.bf16.msra.mxu0 0
    %1155 = vmatprep.subr.bf16.mxu0 0
    %1156 = vmatpush1.bf16.msra.mxu0 0
    %1157 = vmatprep.subr.bf16.mxu0 0
    %1158 = vmatpush1.bf16.msra.mxu0 0
    %1159 = vmatprep.subr.bf16.mxu0 0
    %1160 = vmatpush1.bf16.msra.mxu0 0
    %1161 = vmatprep.subr.bf16.mxu0 0
    %1162 = vmatpush1.bf16.msra.mxu0 0
    %1163 = vmatprep.subr.bf16.mxu0 0
    %1164 = vmatpush1.bf16.msra.mxu0 0
    %1165 = vmatprep.subr.bf16.mxu0 0
    %1166 = vmatpush1.bf16.msra.mxu0 0
    %1167 = vmatprep.subr.bf16.mxu0 0
    %1168 = vmatpush1.bf16.msra.mxu0 0
    %1169 = vmatprep.subr.bf16.mxu0 0
    %1170 = vmatpush1.bf16.msra.mxu0 0
    %1171 = vmatprep.subr.bf16.mxu0 0
    %1172 = vmatpush1.bf16.msra.mxu0 0
    %1173 = vmatprep.mubr.bf16.mxu0 0
    %1174 = vmatmul.mubr.bf16.gmra.mrb[0].mxu0 %v1139
    %v1175 = vpop.f32.mrb[0].mxu0
    %v1176 = vadd.f32 %v1136, %v1175
    %v1177 = vpop.f32.mrb[0].mxu0
    %v1178 = vpop.f32.mrb[0].mxu0
    %v1179 = vpop.f32.mrb[0].mxu0
    %1180 = vdwg.mxu0
    %vm1181 = vcmask 647168
    %v1182 = vsel %vm1181, %v1176, -inf
    %1183 = vmax.xlane.f32.xlu0 %v1182
    %v1184 = vpop.xlane.xlu0 %1183
    %v1185 = vsub.f32 %v1176, %v1184
    %v1186 = vmul.f32 %v1185, 1.442695
    %v1187 = vpow.pop %v1186
    %v1188 = vsel %vm1181, %v1187, 0.0
    %1189 = vadd.xlane.f32.xlu0 %v1188
    %v1190 = vpop.xlane.xlu0 %1189
    %v1191 = vlog2.pop %v1190
    %v1192 = vmul.f32 %v1191, 0.6931472
    %v1193 = vadd.f32 %v1192, %v1184
    %v1194 = vsub.f32 %v1176, %v1193
    %1195 = vst.msk [vmem:[#allocation3] sm:$0x1] %vm1181, %v1194
    // Predicated region
    $region46: #{tpu_custom_call.1} parent=1 // pred_check
      _
    $region47: #{tpu_custom_call.1} parent=1 // pred_check_branch
      %1197 = sbr.rel (0) target = $region49
    $region48: #{tpu_custom_call.1} parent=1 // pred_region
      %s1199 = ssub.s32 16, 16
      %1200 = vsyncadd [#allocation4], %s1199
      %s1202 = sshll.u32 [#allocation3], 4
      %s1203 = int_to_ptr.vmem [resolvable:$true] %s1202
      %1205 = dma.vmem_to_hbm [thread:$0]  %s1203, 16, %s11, [#allocation4]
    $region49: #{tpu_custom_call.1} parent=1 // pred_fallthru
      _
    // Predicated region
    $region50: #{tpu_custom_call.1} parent=1 // pred_check
      _
    $region51: #{tpu_custom_call.1} parent=1 // pred_check_branch
      %1207 = sbr.rel (0) target = $region53
    $region52: #{tpu_custom_call.1} parent=1 // pred_region
      %1208 = dma.done [#allocation4], 16
    $region53: #{tpu_custom_call.1} parent=1 // pred_fallthru
      _
    %1209 = vsyncpa [#allocation4], 1

</llo_original>
